<compile_context>
chip_gen: v7x
topology: tpu7x:2x2x1
jax: 0.10.0
libtpu: 0.0.40
codegen_flags: <defaults>
</compile_context>

<pallas_src>
import functools

import jax
import jax.numpy as jnp
from jax.experimental import pallas as pl
from jax.experimental.pallas import tpu as pltpu


def _round_up(n, m):
    return ((n + m - 1) // m) * m


def mean_net_kernel(x_ref, w1t_ref, b1_ref, w2t_ref, b2_ref, o_ref, *, out3):
    x = x_ref[...]
    w1t = w1t_ref[...]
    if x.dtype != w1t.dtype:
        x = x.astype(w1t.dtype)          # weights pre-cast at init; only x cast here

    # fc1 + ReLU  (MXU matmul, f32 accumulate; bias/ReLU ride free VPU slots)
    h1 = jnp.dot(x, w1t, preferred_element_type=jnp.float32)
    h1 = jnp.maximum(h1 + b1_ref[...], 0.0)      # (tile_b, H) + (1, H)

    w2t = w2t_ref[...]
    if h1.dtype != w2t.dtype:
        h1 = h1.astype(w2t.dtype)

    # fc_mean: matmul against the lane-padded W2 (VMEM-resident), but only the
    # first out3 columns are stored -> no zero-padding ever hits HBM.
    out = jnp.dot(h1, w2t, preferred_element_type=jnp.float32) + b2_ref[...]
    o_ref[...] = out[:, :out3].astype(o_ref.dtype)


def prepare_mean_net_params(w1, b1, w2, b2, *, use_bf16=False):
    """One-time glue: transpose weights, lift biases to rows, pad the fc_mean
    output dim to a 128-lane multiple (VMEM/matmul layout only), and pre-cast
    weights to bf16 if requested. Do this once at init, not per forward."""
    hidden, input_dim = w1.shape
    out3 = w2.shape[0]
    assert w2.shape == (out3, hidden)
    out3_pad = _round_up(max(out3, 1), 128)

    wdtype = jnp.bfloat16 if use_bf16 else jnp.float32

    w1t = jnp.asarray(w1, jnp.float32).T.astype(wdtype)        # [input_dim, hidden]
    b1r = jnp.asarray(b1, jnp.float32).reshape(1, hidden)      # [1, hidden] (f32)

    w2t = jnp.asarray(w2, jnp.float32).T                       # [hidden, out3]
    w2t_pad = jnp.zeros((hidden, out3_pad), jnp.float32).at[:, :out3].set(w2t)
    w2t_pad = w2t_pad.astype(wdtype)
    b2r_pad = jnp.zeros((1, out3_pad), jnp.float32).at[0, :out3].set(
        jnp.asarray(b2, jnp.float32))                          # f32 bias

    return dict(w1t=w1t, b1r=b1r, w2t_pad=w2t_pad, b2r_pad=b2r_pad,
                input_dim=input_dim, hidden=hidden,
                out3=out3, out3_pad=out3_pad)


def _compute_tile_b(batch, tile_b):
    # Cap at (a) the requested tile, (b) half the batch (>=2 grid steps when
    # possible -> both v7x TensorCores run), (c) the whole padded batch.
    half = _round_up(pl.cdiv(batch, 2), 8)
    t = min(tile_b, half, _round_up(batch, 8))
    return max(_round_up(t, 8), 8)


def mean_net_forward(x, params, out_dim, *, tile_b=2048):
    """x: [B, input_dim] float32 (or bf16). params from prepare_mean_net_params."""
    assert out_dim % 3 == 0, "out_dim must be divisible by 3"
    out3 = params["out3"]
    assert out3 == out_dim // 3

    input_dim = params["input_dim"]
    hidden = params["hidden"]
    out3_pad = params["out3_pad"]

    B, xin = x.shape
    assert xin == input_dim

    tile_b_eff = _compute_tile_b(B, tile_b)
    grid = (pl.cdiv(B, tile_b_eff),)      # ragged last tile handled by Pallas

    kernel = functools.partial(mean_net_kernel, out3=out3)

    out = pl.pallas_call(
        kernel,
        out_shape=jax.ShapeDtypeStruct((B, out3), jnp.float32),
        grid_spec=pltpu.PrefetchScalarGridSpec(
            num_scalar_prefetch=0,
            grid=grid,
            in_specs=[
                # x streams per batch tile (last dim == full array dim -> OK).
                pl.BlockSpec((tile_b_eff, input_dim), lambda i: (i, 0)),
                # Weights / biases: constant index_map -> VMEM-resident.
                pl.BlockSpec((input_dim, hidden), lambda i: (0, 0)),
                pl.BlockSpec((1, hidden), lambda i: (0, 0)),
                pl.BlockSpec((hidden, out3_pad), lambda i: (0, 0)),
                pl.BlockSpec((1, out3_pad), lambda i: (0, 0)),
            ],
            # Output block last dim == full array dim (out3), so the (8,128)
            # rule is satisfied; partial last-tile rows are masked on store.
            out_specs=pl.BlockSpec((tile_b_eff, out3), lambda i: (i, 0)),
        ),
        compiler_params=pltpu.CompilerParams(
            # Batch tiles are independent -> shard across v7x's 2 TensorCores.
            dimension_semantics=("parallel",),
        ),
    )(x, params["w1t"], params["b1r"], params["w2t_pad"], params["b2r_pad"])

    # .view(-1, out3) is an identity reshape for 2-D input; kept for fidelity.
    return out.reshape(-1, out3)


def _reference(x, w1, b1, w2, b2, out_dim):
    h1 = jnp.maximum(x @ w1.T + b1, 0.0)
    mean = h1 @ w2.T + b2
    return mean.reshape(-1, out_dim // 3)


if __name__ == "__main__":
    input_dim = 32
    hidden_dim = 64
    out_dim = 12           # out_dim // 3 == 4

    key = jax.random.PRNGKey(0)
    kx, k1, k2, k3, k4, kx2 = jax.random.split(key, 6)

    # Deterministic parameter init (PyTorch Linear layout: [out_features, in_features]).
    bound1 = 1.0 / (input_dim ** 0.5)
    w1 = jax.random.uniform(k1, (hidden_dim, input_dim), jnp.float32, -bound1, bound1)
    b1 = jax.random.uniform(k2, (hidden_dim,), jnp.float32, -bound1, bound1)
    bound2 = 1.0 / (hidden_dim ** 0.5)
    w2 = jax.random.uniform(k3, (out_dim // 3, hidden_dim), jnp.float32, -bound2, bound2)
    b2 = jax.random.uniform(k4, (out_dim // 3,), jnp.float32, -bound2, bound2)

    # One-time parameter prep (hoisted out of the per-call hot path).
    params = prepare_mean_net_params(w1, b1, w2, b2)

    # --- Check 1: small batch (single tile). ---
    batch = 8
    x = jax.random.normal(kx, (batch, input_dim), dtype=jnp.float32)
    mean = mean_net_forward(x, params, out_dim)
    jax.block_until_ready(mean)
    ref = _reference(x, w1, b1, w2, b2, out_dim)
    assert mean.shape == (batch, out_dim // 3)
    assert jnp.allclose(mean, ref, atol=1e-5, rtol=1e-5)

    # --- Check 2: batch exercising multiple grid steps + ragged last tile. ---
    batch2 = 300           # tile_b=128 -> grid=(3,), last tile 44 rows (masked store)
    x2 = jax.random.normal(kx2, (batch2, input_dim), dtype=jnp.float32)
    mean2 = mean_net_forward(x2, params, out_dim, tile_b=128)
    jax.block_until_ready(mean2)
    ref2 = _reference(x2, w1, b1, w2, b2, out_dim)
    assert mean2.shape == (batch2, out_dim // 3)
    assert jnp.allclose(mean2, ref2, atol=1e-5, rtol=1e-5)

    # --- Check 3: bf16 weight path (pre-cast at init), loose tolerance. ---
    params_bf16 = prepare_mean_net_params(w1, b1, w2, b2, use_bf16=True)
    mean3 = mean_net_forward(x2, params_bf16, out_dim)
    jax.block_until_ready(mean3)
    assert mean3.shape == (batch2, out_dim // 3)
    assert jnp.allclose(mean3, ref2, atol=3e-2, rtol=3e-2)

    print("KERNEL_OK")
</pallas_src>

<mosaic_0001>
module attributes {stable_mosaic.version = 11 : i64} {
  func.func @mean_net_kernel(%arg0: i32, %arg1: memref<8x32xf32, #tpu.memory_space<vmem>>, %arg2: memref<32x64xf32, #tpu.memory_space<vmem>>, %arg3: memref<1x64xf32, #tpu.memory_space<vmem>>, %arg4: memref<64x128xf32, #tpu.memory_space<vmem>>, %arg5: memref<1x128xf32, #tpu.memory_space<vmem>>, %arg6: memref<8x4xf32, #tpu.memory_space<vmem>>) attributes {dimension_semantics = [#tpu.dimension_semantics<parallel>], iteration_bounds = array<i64: 1>, scalar_prefetch = 0 : i64, scratch_operands = 0 : i64, tpu.core_type = #tpu.core_type<tc>, window_params = [{transform_indices = @transform_0, window_bounds = array<i64: 8, 32>}, {pipeline_mode = #tpu.pipeline_mode<synchronous>, transform_indices = @transform_1, window_bounds = array<i64: 32, 64>}, {pipeline_mode = #tpu.pipeline_mode<synchronous>, transform_indices = @transform_2, window_bounds = array<i64: 1, 64>}, {pipeline_mode = #tpu.pipeline_mode<synchronous>, transform_indices = @transform_3, window_bounds = array<i64: 64, 128>}, {pipeline_mode = #tpu.pipeline_mode<synchronous>, transform_indices = @transform_4, window_bounds = array<i64: 1, 128>}, {transform_indices = @transform_5, window_bounds = array<i64: 8, 4>}]} {
    %c0 = arith.constant 0 : index
    %c0_0 = arith.constant 0 : index
    %0 = vector.load %arg1[%c0, %c0_0] : memref<8x32xf32, #tpu.memory_space<vmem>>, vector<8x32xf32>
    %c0_1 = arith.constant 0 : index
    %c0_2 = arith.constant 0 : index
    %1 = vector.load %arg2[%c0_1, %c0_2] : memref<32x64xf32, #tpu.memory_space<vmem>>, vector<32x64xf32>
    %cst = arith.constant dense<0.000000e+00> : vector<8x64xf32>
    %2 = tpu.matmul %0, %1, %cst {dimension_numbers = #tpu.dot_dimension_numbers<[1], [0], [0], [1], [0, 0, 1, 1], [], []>} : vector<8x32xf32>, vector<32x64xf32>, vector<8x64xf32> -> vector<8x64xf32>
    %c0_3 = arith.constant 0 : index
    %c0_4 = arith.constant 0 : index
    %3 = vector.load %arg3[%c0_3, %c0_4] : memref<1x64xf32, #tpu.memory_space<vmem>>, vector<1x64xf32>
    %4 = vector.broadcast %3 : vector<1x64xf32> to vector<8x64xf32>
    %5 = arith.addf %2, %4 : vector<8x64xf32>
    %cst_5 = arith.constant 0.000000e+00 : f32
    %6 = vector.broadcast %cst_5 : f32 to vector<8x64xf32>
    %7 = arith.maximumf %5, %6 : vector<8x64xf32>
    %c0_6 = arith.constant 0 : index
    %c0_7 = arith.constant 0 : index
    %8 = vector.load %arg4[%c0_6, %c0_7] : memref<64x128xf32, #tpu.memory_space<vmem>>, vector<64x128xf32>
    %cst_8 = arith.constant dense<0.000000e+00> : vector<8x128xf32>
    %9 = tpu.matmul %7, %8, %cst_8 {dimension_numbers = #tpu.dot_dimension_numbers<[1], [0], [0], [1], [0, 0, 1, 1], [], []>} : vector<8x64xf32>, vector<64x128xf32>, vector<8x128xf32> -> vector<8x128xf32>
    %c0_9 = arith.constant 0 : index
    %c0_10 = arith.constant 0 : index
    %10 = vector.load %arg5[%c0_9, %c0_10] : memref<1x128xf32, #tpu.memory_space<vmem>>, vector<1x128xf32>
    %11 = vector.broadcast %10 : vector<1x128xf32> to vector<8x128xf32>
    %12 = arith.addf %9, %11 : vector<8x128xf32>
    %13 = vector.extract_strided_slice %12 {offsets = [0, 0], sizes = [8, 4], strides = [1, 1]} : vector<8x128xf32> to vector<8x4xf32>
    %c0_11 = arith.constant 0 : index
    %c0_12 = arith.constant 0 : index
    %14 = vector.load %arg6[%c0_11, %c0_12] : memref<8x4xf32, #tpu.memory_space<vmem>>, vector<8x4xf32>
    tpu.vector_store %arg6[%c0_11, %c0_12], %13 {strides = array<i32>} : memref<8x4xf32, #tpu.memory_space<vmem>>, vector<8x4xf32>,
    return
  }
  func.func @transform_0(%arg0: i32) -> (i32, i32) {
    %c0_i32 = arith.constant 0 : i32
    %c0_i32_0 = arith.constant 0 : i32
    return %arg0, %c0_i32 : i32, i32
  }
  func.func @transform_1(%arg0: i32) -> (i32, i32) {
    %c0_i32 = arith.constant 0 : i32
    %c0_i32_0 = arith.constant 0 : i32
    %c0_i32_1 = arith.constant 0 : i32
    return %c0_i32, %c0_i32_0 : i32, i32
  }
  func.func @transform_2(%arg0: i32) -> (i32, i32) {
    %c0_i32 = arith.constant 0 : i32
    %c0_i32_0 = arith.constant 0 : i32
    %c0_i32_1 = arith.constant 0 : i32
    return %c0_i32, %c0_i32_0 : i32, i32
  }
  func.func @transform_3(%arg0: i32) -> (i32, i32) {
    %c0_i32 = arith.constant 0 : i32
    %c0_i32_0 = arith.constant 0 : i32
    %c0_i32_1 = arith.constant 0 : i32
    return %c0_i32, %c0_i32_0 : i32, i32
  }
  func.func @transform_4(%arg0: i32) -> (i32, i32) {
    %c0_i32 = arith.constant 0 : i32
    %c0_i32_0 = arith.constant 0 : i32
    %c0_i32_1 = arith.constant 0 : i32
    return %c0_i32, %c0_i32_0 : i32, i32
  }
  func.func @transform_5(%arg0: i32) -> (i32, i32) {
    %c0_i32 = arith.constant 0 : i32
    %c0_i32_0 = arith.constant 0 : i32
    return %arg0, %c0_i32 : i32, i32
  }
}

</mosaic_0001>

<llo_original>
// kernel: tpu_custom_call.1
$region0: #{tpu_custom_call.1}
  #allocation0 [shape = 'u32[]', space=smem, size = 0x4, offset = 0x4, fixed_abs, tag = 'smem constant byte address 0x4 - core index']
  #allocation1 [shape = 'u32[144,128]{1,0:T(1,128)}', space=vmem, size = 0x12000, scoped, tag = 'internal scratch']
  %s0 = inlined_call_operand.hbm [shape: f32[8,32], index: 0, kind: input, shape index: {}]
  %s1 = inlined_call_operand.hbm [shape: f32[32,64], index: 1, kind: input, shape index: {}]
  %s2 = inlined_call_operand.vmem [shape: f32[1,64], index: 2, kind: input, shape index: {}]
  %s3 = inlined_call_operand.hbm [shape: f32[64,128], index: 3, kind: input, shape index: {}]
  %s4 = inlined_call_operand.vmem [shape: f32[1,128], index: 4, kind: input, shape index: {}]
  %s5 = inlined_call_operand.vmem [shape: f32[8,4], index: 5, kind: output, shape index: {}]
  %s6 = sld [smem:[#allocation0]]
  $region42: #{tpu_custom_call.1} parent=0
    _
  %s8 = ssub.s32 1, %s6
  %s9 = scalar_select 0, %s8, %s6
  $region1: #{tpu_custom_call.1} parent=0
    #allocation2 [shape = 'u8[4096]{0}', space=vmem, size = 0x1000, scoped, tag = 'input window, operand 0, single buffered']
    #allocation3 [shape = 's32[1]{0}', space=sflag, size = 0x4, scoped, tag = 'scoped memory for tpu_custom_call.1']
    #allocation4 [shape = 'u8[16384]{0}', space=vmem, size = 0x4000, scoped, tag = 'input window, operand 1, single buffered']
    #allocation5 [shape = 's32[1]{0}', space=sflag, size = 0x4, scoped, tag = 'scoped memory for tpu_custom_call.1']
    #allocation6 [shape = 'u8[32768]{0}', space=vmem, size = 0x8000, scoped, tag = 'input window, operand 3, single buffered']
    %10 = vsyncpa [#allocation3], 0
    %11 = vsyncpa [#allocation5], 0
    // Predicated region
    $region2: #{tpu_custom_call.1} parent=1 // pred_check
      _
    $region3: #{tpu_custom_call.1} parent=1 // pred_check_branch
      %13 = sbr.rel (0) target = $region5
    $region4: #{tpu_custom_call.1} parent=1 // pred_region
      %s15 = ssub.s32 128, 128
      %16 = vsyncadd [#allocation3], %s15
      %s18 = sshll.u32 [#allocation2], 4
      %s19 = int_to_ptr.vmem [resolvable:$true] %s18
      %21 = dma.hbm_to_vmem [thread:$0]  %s0, 128, %s19, [#allocation3]
    $region5: #{tpu_custom_call.1} parent=1 // pred_fallthru
      _
    // Predicated region
    $region6: #{tpu_custom_call.1} parent=1 // pred_check
      _
    $region7: #{tpu_custom_call.1} parent=1 // pred_check_branch
      %23 = sbr.rel (0) target = $region9
    $region8: #{tpu_custom_call.1} parent=1 // pred_region
      %s25 = ssub.s32 512, 512
      %26 = vsyncadd [#allocation5], %s25
      %s27 = sshll.u32 [#allocation4], 4
      %s28 = int_to_ptr.vmem [resolvable:$true] %s27
      %33 = dma.hbm_to_vmem [thread:$0]  %s1, 512, %s28, [#allocation5], 128, 128, 8
    $region9: #{tpu_custom_call.1} parent=1 // pred_fallthru
      _
    // Predicated region
    $region10: #{tpu_custom_call.1} parent=1 // pred_check
      _
    $region11: #{tpu_custom_call.1} parent=1 // pred_check_branch
      %35 = sbr.rel (0) target = $region13
    $region12: #{tpu_custom_call.1} parent=1 // pred_region
      _
    $region13: #{tpu_custom_call.1} parent=1 // pred_fallthru
      _
    // Predicated region
    $region14: #{tpu_custom_call.1} parent=1 // pred_check
      _
    $region15: #{tpu_custom_call.1} parent=1 // pred_check_branch
      %37 = sbr.rel (0) target = $region17
    $region16: #{tpu_custom_call.1} parent=1 // pred_region
      %s39 = ssub.s32 1024, 1024
      %40 = vsyncadd [#allocation5], %s39
      %s41 = sshll.u32 [#allocation6], 4
      %s42 = int_to_ptr.vmem [resolvable:$true] %s41
      %47 = dma.hbm_to_vmem [thread:$0]  %s3, 1024, %s42, [#allocation5], 128, 128, 8
    $region17: #{tpu_custom_call.1} parent=1 // pred_fallthru
      _
    // Predicated region
    $region18: #{tpu_custom_call.1} parent=1 // pred_check
      _
    $region19: #{tpu_custom_call.1} parent=1 // pred_check_branch
      %49 = sbr.rel (0) target = $region21
    $region20: #{tpu_custom_call.1} parent=1 // pred_region
      _
    $region21: #{tpu_custom_call.1} parent=1 // pred_fallthru
      _
    // Predicated region
    $region22: #{tpu_custom_call.1} parent=1 // pred_check
      _
    $region23: #{tpu_custom_call.1} parent=1 // pred_check_branch
      %51 = sbr.rel (0) target = $region25
    $region24: #{tpu_custom_call.1} parent=1 // pred_region
      %52 = dma.done [#allocation3], 128
    $region25: #{tpu_custom_call.1} parent=1 // pred_fallthru
      _
    // Predicated region
    $region26: #{tpu_custom_call.1} parent=1 // pred_check
      _
    $region27: #{tpu_custom_call.1} parent=1 // pred_check_branch
      %54 = sbr.rel (0) target = $region29
    $region28: #{tpu_custom_call.1} parent=1 // pred_region
      %55 = dma.done [#allocation5], 512
    $region29: #{tpu_custom_call.1} parent=1 // pred_fallthru
      _
    // Predicated region
    $region30: #{tpu_custom_call.1} parent=1 // pred_check
      _
    $region31: #{tpu_custom_call.1} parent=1 // pred_check_branch
      %57 = sbr.rel (0) target = $region33
    $region32: #{tpu_custom_call.1} parent=1 // pred_region
      %58 = dma.done [#allocation5], 1024
    $region33: #{tpu_custom_call.1} parent=1 // pred_fallthru
      _
    %v59 = vld [vmem:[#allocation2] sm:$0xff]
    %v60 = vld [vmem:[#allocation4] sm:$0xff]
    %v61 = vld [vmem:[#allocation4 + $0x8] sm:$0xff]
    %v62 = vld [vmem:[#allocation4 + $0x10] sm:$0xff]
    %v63 = vld [vmem:[#allocation4 + $0x18] sm:$0xff]
    %v64 = vld [vmem:[%s2] sm:$0x1]
    %v66 = vlaneseq
    %v67 = vshrl.u32 %v66, 7
    %v68 = vsub.s32 0, %v67
    %v69 = vrot.slane %v64, %v68
    %vm71 = vcmask 261120
    %v73 = vsel %vm71, %v59, 0
    %75 = vmatprep.subr.mxu0 0.0
    %76 = vmatpush1.msra.mxu0 %v60
    %77 = vmatprep.subr.mxu0 0.0
    %78 = vmatpush1.msra.mxu0 %v61
    %79 = vmatprep.subr.mxu0 0.0
    %80 = vmatpush1.msra.mxu0 %v62
    %81 = vmatprep.subr.mxu0 0.0
    %82 = vmatpush1.msra.mxu0 %v63
    %83 = vmatprep.subr.mxu0 0.0
    %84 = vmatpush1.msra.mxu0 0.0
    %85 = vmatprep.subr.mxu0 0.0
    %86 = vmatpush1.msra.mxu0 0.0
    %87 = vmatprep.subr.mxu0 0.0
    %88 = vmatpush1.msra.mxu0 0.0
    %89 = vmatprep.subr.mxu0 0.0
    %90 = vmatpush1.msra.mxu0 0.0
    %91 = vmatprep.subr.mxu0 0.0
    %92 = vmatpush1.msra.mxu0 0.0
    %93 = vmatprep.subr.mxu0 0.0
    %94 = vmatpush1.msra.mxu0 0.0
    %95 = vmatprep.subr.mxu0 0.0
    %96 = vmatpush1.msra.mxu0 0.0
    %97 = vmatprep.subr.mxu0 0.0
    %98 = vmatpush1.msra.mxu0 0.0
    %99 = vmatprep.subr.mxu0 0.0
    %100 = vmatpush1.msra.mxu0 0.0
    %101 = vmatprep.subr.mxu0 0.0
    %102 = vmatpush1.msra.mxu0 0.0
    %103 = vmatprep.subr.mxu0 0.0
    %104 = vmatpush1.msra.mxu0 0.0
    %105 = vmatprep.subr.mxu0 0.0
    %106 = vmatpush1.msra.mxu0 0.0
    %107 = vmatprep.subr.mxu0 0.0
    %108 = vmatpush1.msra.mxu0 0.0
    %109 = vmatprep.subr.mxu0 0.0
    %110 = vmatpush1.msra.mxu0 0.0
    %111 = vmatprep.subr.mxu0 0.0
    %112 = vmatpush1.msra.mxu0 0.0
    %113 = vmatprep.subr.mxu0 0.0
    %114 = vmatpush1.msra.mxu0 0.0
    %115 = vmatprep.subr.mxu0 0.0
    %116 = vmatpush1.msra.mxu0 0.0
    %117 = vmatprep.subr.mxu0 0.0
    %118 = vmatpush1.msra.mxu0 0.0
    %119 = vmatprep.subr.mxu0 0.0
    %120 = vmatpush1.msra.mxu0 0.0
    %121 = vmatprep.subr.mxu0 0.0
    %122 = vmatpush1.msra.mxu0 0.0
    %123 = vmatprep.subr.mxu0 0.0
    %124 = vmatpush1.msra.mxu0 0.0
    %125 = vmatprep.subr.mxu0 0.0
    %126 = vmatpush1.msra.mxu0 0.0
    %127 = vmatprep.subr.mxu0 0.0
    %128 = vmatpush1.msra.mxu0 0.0
    %129 = vmatprep.subr.mxu0 0.0
    %130 = vmatpush1.msra.mxu0 0.0
    %131 = vmatprep.subr.mxu0 0.0
    %132 = vmatpush1.msra.mxu0 0.0
    %133 = vmatprep.subr.mxu0 0.0
    %134 = vmatpush1.msra.mxu0 0.0
    %135 = vmatprep.subr.mxu0 0.0
    %136 = vmatpush1.msra.mxu0 0.0
    %137 = vmatprep.subr.mxu0 0.0
    %138 = vmatpush1.msra.mxu0 0.0
    %139 = vmatprep.mubr.f32.mxu0 0.0
    %140 = vmatmul.mubr.f32.gmra.mrb[0].mxu0 %v73
    %v141 = vpop.f32.mrb[0].mxu0
    %v142 = vadd.f32 %v69, %v141
    %v143 = vpop.f32.mrb[0].mxu0
    %144 = vdwg.mxu0
    %v145 = vmax.f32 %v142, 0.0
    %v146 = vld [vmem:[#allocation6] sm:$0xff]
    %v147 = vld [vmem:[#allocation6 + $0x8] sm:$0xff]
    %v148 = vld [vmem:[#allocation6 + $0x10] sm:$0xff]
    %v149 = vld [vmem:[#allocation6 + $0x18] sm:$0xff]
    %v150 = vld [vmem:[#allocation6 + $0x20] sm:$0xff]
    %v151 = vld [vmem:[#allocation6 + $0x28] sm:$0xff]
    %v152 = vld [vmem:[#allocation6 + $0x30] sm:$0xff]
    %v153 = vld [vmem:[#allocation6 + $0x38] sm:$0xff]
    %v154 = vld [vmem:[%s4] sm:$0x1]
    %v156 = vlaneseq
    %v157 = vshrl.u32 %v156, 7
    %v158 = vsub.s32 0, %v157
    %v159 = vrot.slane %v154, %v158
    %vm161 = vcmask 523264
    %v163 = vsel %vm161, %v145, 0
    %165 = vmatprep.subr.mxu0 0.0
    %166 = vmatpush1.msra.mxu0 %v146
    %167 = vmatprep.subr.mxu0 0.0
    %168 = vmatpush1.msra.mxu0 %v147
    %169 = vmatprep.subr.mxu0 0.0
    %170 = vmatpush1.msra.mxu0 %v148
    %171 = vmatprep.subr.mxu0 0.0
    %172 = vmatpush1.msra.mxu0 %v149
    %173 = vmatprep.subr.mxu0 0.0
    %174 = vmatpush1.msra.mxu0 %v150
    %175 = vmatprep.subr.mxu0 0.0
    %176 = vmatpush1.msra.mxu0 %v151
    %177 = vmatprep.subr.mxu0 0.0
    %178 = vmatpush1.msra.mxu0 %v152
    %179 = vmatprep.subr.mxu0 0.0
    %180 = vmatpush1.msra.mxu0 %v153
    %181 = vmatprep.subr.mxu0 0.0
    %182 = vmatpush1.msra.mxu0 0.0
    %183 = vmatprep.subr.mxu0 0.0
    %184 = vmatpush1.msra.mxu0 0.0
    %185 = vmatprep.subr.mxu0 0.0
    %186 = vmatpush1.msra.mxu0 0.0
    %187 = vmatprep.subr.mxu0 0.0
    %188 = vmatpush1.msra.mxu0 0.0
    %189 = vmatprep.subr.mxu0 0.0
    %190 = vmatpush1.msra.mxu0 0.0
    %191 = vmatprep.subr.mxu0 0.0
    %192 = vmatpush1.msra.mxu0 0.0
    %193 = vmatprep.subr.mxu0 0.0
    %194 = vmatpush1.msra.mxu0 0.0
    %195 = vmatprep.subr.mxu0 0.0
    %196 = vmatpush1.msra.mxu0 0.0
    %197 = vmatprep.subr.mxu0 0.0
    %198 = vmatpush1.msra.mxu0 0.0
    %199 = vmatprep.subr.mxu0 0.0
    %200 = vmatpush1.msra.mxu0 0.0
    %201 = vmatprep.subr.mxu0 0.0
    %202 = vmatpush1.msra.mxu0 0.0
    %203 = vmatprep.subr.mxu0 0.0
    %204 = vmatpush1.msra.mxu0 0.0
    %205 = vmatprep.subr.mxu0 0.0
    %206 = vmatpush1.msra.mxu0 0.0
    %207 = vmatprep.subr.mxu0 0.0
    %208 = vmatpush1.msra.mxu0 0.0
    %209 = vmatprep.subr.mxu0 0.0
    %210 = vmatpush1.msra.mxu0 0.0
    %211 = vmatprep.subr.mxu0 0.0
    %212 = vmatpush1.msra.mxu0 0.0
    %213 = vmatprep.subr.mxu0 0.0
    %214 = vmatpush1.msra.mxu0 0.0
    %215 = vmatprep.subr.mxu0 0.0
    %216 = vmatpush1.msra.mxu0 0.0
    %217 = vmatprep.subr.mxu0 0.0
    %218 = vmatpush1.msra.mxu0 0.0
    %219 = vmatprep.subr.mxu0 0.0
    %220 = vmatpush1.msra.mxu0 0.0
    %221 = vmatprep.subr.mxu0 0.0
    %222 = vmatpush1.msra.mxu0 0.0
    %223 = vmatprep.subr.mxu0 0.0
    %224 = vmatpush1.msra.mxu0 0.0
    %225 = vmatprep.subr.mxu0 0.0
    %226 = vmatpush1.msra.mxu0 0.0
    %227 = vmatprep.subr.mxu0 0.0
    %228 = vmatpush1.msra.mxu0 0.0
    %229 = vmatprep.mubr.f32.mxu0 0.0
    %230 = vmatmul.mubr.f32.gmra.mrb[0].mxu0 %v163
    %v231 = vpop.f32.mrb[0].mxu0
    %v232 = vadd.f32 %v159, %v231
    %v233 = vpop.f32.mrb[0].mxu0
    %234 = vdwg.mxu0
    %vm235 = vcmask 31744
    %236 = vst.msk [vmem:[%s5] sm:$0xff] %vm235, %v232
    // Predicated region
    $region34: #{tpu_custom_call.1} parent=1 // pred_check
      _
    $region35: #{tpu_custom_call.1} parent=1 // pred_check_branch
      %238 = sbr.rel (0) target = $region37
    $region36: #{tpu_custom_call.1} parent=1 // pred_region
      _
    $region37: #{tpu_custom_call.1} parent=1 // pred_fallthru
      _
    // Predicated region
    $region38: #{tpu_custom_call.1} parent=1 // pred_check
      _
    $region39: #{tpu_custom_call.1} parent=1 // pred_check_branch
      %240 = sbr.rel (0) target = $region41
    $region40: #{tpu_custom_call.1} parent=1 // pred_region
      _
    $region41: #{tpu_custom_call.1} parent=1 // pred_fallthru
      _
    %241 = vsyncpa [#allocation3], 1
    %242 = vsyncpa [#allocation5], 1

</llo_original>
